<compile_context>
chip_gen: v7x
topology: tpu7x:2x2x1
jax: 0.10.0
libtpu: 0.0.40
codegen_flags: <defaults>
</compile_context>

<pallas_src>
import jax
import jax.numpy as jnp
from jax.experimental import pallas as pl
from jax.experimental.pallas import tpu as pltpu

ALPHABET_SIZE = 10
EMBED_DIM = 10
MAX_LEN = 10

LANE = 128
SUBLANE = 8


def _round_up(x, m):
    return (x + m - 1) // m * m


def _tok_pos_emb_kernel(tok_ref, pos_idx_ref, tok_tab_ref, pos_tab_ref, o_ref):
    # tok_ref:     (TILE_N, 1)      int32   flattened token ids (one per row)
    # pos_idx_ref: (TILE_N, 1)      int32   position index per row (row % S)
    # tok_tab_ref: (A, D_PAD)       float32 token table, lane-padded, resident
    # pos_tab_ref: (S, D_PAD)       float32 first-S position rows, resident
    # o_ref:       (TILE_N, D_PAD)  float32 lane-dense output tile
    tok = tok_ref[...]                       # (TILE_N, 1)
    pos = pos_idx_ref[...]                   # (TILE_N, 1)
    tok_tab = tok_tab_ref[...]               # (A, D_PAD)
    pos_tab = pos_tab_ref[...]               # (S, D_PAD)

    acc = jnp.zeros(o_ref.shape, jnp.float32)

    # Pure-VPU gather: broadcast-compare-select over the (small) token table.
    for a in range(tok_tab.shape[0]):
        row = tok_tab[a:a + 1, :]            # (1, D_PAD)
        acc = jnp.where(tok == a, row, acc)  # (TILE_N, D_PAD)

    # Fused position-embedding add, same compare-select trick.
    for s in range(pos_tab.shape[0]):
        row = pos_tab[s:s + 1, :]            # (1, D_PAD)
        acc = acc + jnp.where(pos == s, row, 0.0)

    o_ref[...] = acc


def token_and_position_embedding(tokens, token_table, pos_table):
    """tokens: int32 [B, S]; token_table: [A, D]; pos_table: [max_len, D]."""
    B, S = tokens.shape
    A, D = token_table.shape
    max_len = pos_table.shape[0]
    assert S <= max_len, f"sequence length {S} exceeds max_len {max_len}"

    D_PAD = _round_up(D, LANE)
    N = B * S
    # One big row tile at small scale; 256-row parallel tiles once N is large
    # (keeps >=2 grid steps so both v7x TensorCores are used at real sizes).
    if N <= 256:
        TILE_N = _round_up(N, SUBLANE)
        N_PAD = TILE_N
    else:
        TILE_N = 256
        N_PAD = _round_up(N, TILE_N)
    num_tiles = N_PAD // TILE_N

    # Lane-pad tables so all loads/stores are full 128-lane vectors.
    tok_tab = jnp.zeros((A, D_PAD), jnp.float32).at[:, :D].set(token_table)
    pos_tab = jnp.zeros((S, D_PAD), jnp.float32).at[:, :D].set(pos_table[:S])

    # Flatten + pad token ids and per-row position indices.
    tok_flat = jnp.zeros((N_PAD, 1), jnp.int32)
    tok_flat = tok_flat.at[:N, 0].set(tokens.reshape(-1).astype(jnp.int32))
    pos_idx = jnp.zeros((N_PAD, 1), jnp.int32)
    pos_idx = pos_idx.at[:N, 0].set(jnp.tile(jnp.arange(S, dtype=jnp.int32), B))

    cost = pl.CostEstimate(
        flops=int(2 * N_PAD * D_PAD * (A + S)),
        transcendentals=0,
        bytes_accessed=int(N_PAD * D_PAD * 4      # output
                           + N_PAD * 2 * 4        # ids + pos indices
                           + (A + S) * D_PAD * 4  # tables (resident)
                           ),
    )

    out = pl.pallas_call(
        _tok_pos_emb_kernel,
        out_shape=jax.ShapeDtypeStruct((N_PAD, D_PAD), jnp.float32),
        grid_spec=pltpu.PrefetchScalarGridSpec(
            num_scalar_prefetch=0,
            grid=(num_tiles,),
            in_specs=[
                pl.BlockSpec((TILE_N, 1), lambda i: (i, 0)),
                pl.BlockSpec((TILE_N, 1), lambda i: (i, 0)),
                pl.BlockSpec((A, D_PAD), lambda i: (0, 0)),   # resident
                pl.BlockSpec((S, D_PAD), lambda i: (0, 0)),   # resident
            ],
            out_specs=pl.BlockSpec((TILE_N, D_PAD), lambda i: (i, 0)),
        ),
        compiler_params=pltpu.CompilerParams(
            dimension_semantics=("parallel",)),
        cost_estimate=cost,
    )(tok_flat, pos_idx, tok_tab, pos_tab)

    # Strip row / lane padding and restore (B, S, D).
    return out[:N, :D].reshape(B, S, D)


if __name__ == "__main__":
    key = jax.random.PRNGKey(0)
    k_tok_tab, k_pos_tab, k_ids = jax.random.split(key, 3)

    # nn.Embedding default init: N(0, 1)
    token_table = jax.random.normal(k_tok_tab, (ALPHABET_SIZE, EMBED_DIM),
                                    dtype=jnp.float32)
    pos_table = jax.random.normal(k_pos_tab, (MAX_LEN, EMBED_DIM),
                                  dtype=jnp.float32)

    B, S = 2, 8
    tokens = jax.random.randint(k_ids, (B, S), 0, ALPHABET_SIZE,
                                dtype=jnp.int32)

    out = token_and_position_embedding(tokens, token_table, pos_table)
    out = jax.block_until_ready(out)

    # reference check in plain JAX
    ref = token_table[tokens] + pos_table[:S][None, :, :]
    assert out.shape == (B, S, EMBED_DIM)
    assert jnp.allclose(out, ref, atol=1e-5), "mismatch vs reference"

    print("KERNEL_OK")
</pallas_src>

<mosaic_0001>
module attributes {stable_mosaic.version = 11 : i64} {
  func.func @_tok_pos_emb_kernel(%arg0: i32, %arg1: memref<16x1xi32, #tpu.memory_space<vmem>>, %arg2: memref<16x1xi32, #tpu.memory_space<vmem>>, %arg3: memref<10x128xf32, #tpu.memory_space<vmem>>, %arg4: memref<8x128xf32, #tpu.memory_space<vmem>>, %arg5: memref<16x128xf32, #tpu.memory_space<vmem>>) attributes {dimension_semantics = [#tpu.dimension_semantics<parallel>], iteration_bounds = array<i64: 1>, scalar_prefetch = 0 : i64, scratch_operands = 0 : i64, tpu.core_type = #tpu.core_type<tc>, window_params = [{transform_indices = @transform_0, window_bounds = array<i64: 16, 1>}, {transform_indices = @transform_1, window_bounds = array<i64: 16, 1>}, {pipeline_mode = #tpu.pipeline_mode<synchronous>, transform_indices = @transform_2, window_bounds = array<i64: 10, 128>}, {pipeline_mode = #tpu.pipeline_mode<synchronous>, transform_indices = @transform_3, window_bounds = array<i64: 8, 128>}, {transform_indices = @transform_4, window_bounds = array<i64: 16, 128>}]} {
    %c0 = arith.constant 0 : index
    %c0_0 = arith.constant 0 : index
    %0 = vector.load %arg1[%c0, %c0_0] : memref<16x1xi32, #tpu.memory_space<vmem>>, vector<16x1xi32>
    %c0_1 = arith.constant 0 : index
    %c0_2 = arith.constant 0 : index
    %1 = vector.load %arg2[%c0_1, %c0_2] : memref<16x1xi32, #tpu.memory_space<vmem>>, vector<16x1xi32>
    %c0_3 = arith.constant 0 : index
    %c0_4 = arith.constant 0 : index
    %2 = vector.load %arg3[%c0_3, %c0_4] : memref<10x128xf32, #tpu.memory_space<vmem>>, vector<10x128xf32>
    %c0_5 = arith.constant 0 : index
    %c0_6 = arith.constant 0 : index
    %3 = vector.load %arg4[%c0_5, %c0_6] : memref<8x128xf32, #tpu.memory_space<vmem>>, vector<8x128xf32>
    %cst = arith.constant 0.000000e+00 : f32
    %4 = vector.broadcast %cst : f32 to vector<16x128xf32>
    %5 = vector.extract_strided_slice %2 {offsets = [0, 0], sizes = [1, 128], strides = [1, 1]} : vector<10x128xf32> to vector<1x128xf32>
    %c0_i32 = arith.constant 0 : i32
    %6 = vector.broadcast %c0_i32 : i32 to vector<16x1xi32>
    %7 = arith.cmpi eq, %0, %6 : vector<16x1xi32>
    %8 = vector.shape_cast %7 : vector<16x1xi1> to vector<16x1xi1>
    %9 = vector.broadcast %8 : vector<16x1xi1> to vector<16x128xi1>
    %10 = vector.shape_cast %5 : vector<1x128xf32> to vector<1x128xf32>
    %11 = vector.broadcast %10 : vector<1x128xf32> to vector<16x128xf32>
    %12 = arith.select %9, %11, %4 : vector<16x128xi1>, vector<16x128xf32>
    %13 = vector.extract_strided_slice %2 {offsets = [1, 0], sizes = [1, 128], strides = [1, 1]} : vector<10x128xf32> to vector<1x128xf32>
    %c1_i32 = arith.constant 1 : i32
    %14 = vector.broadcast %c1_i32 : i32 to vector<16x1xi32>
    %15 = arith.cmpi eq, %0, %14 : vector<16x1xi32>
    %16 = vector.shape_cast %15 : vector<16x1xi1> to vector<16x1xi1>
    %17 = vector.broadcast %16 : vector<16x1xi1> to vector<16x128xi1>
    %18 = vector.shape_cast %13 : vector<1x128xf32> to vector<1x128xf32>
    %19 = vector.broadcast %18 : vector<1x128xf32> to vector<16x128xf32>
    %20 = arith.select %17, %19, %12 : vector<16x128xi1>, vector<16x128xf32>
    %21 = vector.extract_strided_slice %2 {offsets = [2, 0], sizes = [1, 128], strides = [1, 1]} : vector<10x128xf32> to vector<1x128xf32>
    %c2_i32 = arith.constant 2 : i32
    %22 = vector.broadcast %c2_i32 : i32 to vector<16x1xi32>
    %23 = arith.cmpi eq, %0, %22 : vector<16x1xi32>
    %24 = vector.shape_cast %23 : vector<16x1xi1> to vector<16x1xi1>
    %25 = vector.broadcast %24 : vector<16x1xi1> to vector<16x128xi1>
    %26 = vector.shape_cast %21 : vector<1x128xf32> to vector<1x128xf32>
    %27 = vector.broadcast %26 : vector<1x128xf32> to vector<16x128xf32>
    %28 = arith.select %25, %27, %20 : vector<16x128xi1>, vector<16x128xf32>
    %29 = vector.extract_strided_slice %2 {offsets = [3, 0], sizes = [1, 128], strides = [1, 1]} : vector<10x128xf32> to vector<1x128xf32>
    %c3_i32 = arith.constant 3 : i32
    %30 = vector.broadcast %c3_i32 : i32 to vector<16x1xi32>
    %31 = arith.cmpi eq, %0, %30 : vector<16x1xi32>
    %32 = vector.shape_cast %31 : vector<16x1xi1> to vector<16x1xi1>
    %33 = vector.broadcast %32 : vector<16x1xi1> to vector<16x128xi1>
    %34 = vector.shape_cast %29 : vector<1x128xf32> to vector<1x128xf32>
    %35 = vector.broadcast %34 : vector<1x128xf32> to vector<16x128xf32>
    %36 = arith.select %33, %35, %28 : vector<16x128xi1>, vector<16x128xf32>
    %37 = vector.extract_strided_slice %2 {offsets = [4, 0], sizes = [1, 128], strides = [1, 1]} : vector<10x128xf32> to vector<1x128xf32>
    %c4_i32 = arith.constant 4 : i32
    %38 = vector.broadcast %c4_i32 : i32 to vector<16x1xi32>
    %39 = arith.cmpi eq, %0, %38 : vector<16x1xi32>
    %40 = vector.shape_cast %39 : vector<16x1xi1> to vector<16x1xi1>
    %41 = vector.broadcast %40 : vector<16x1xi1> to vector<16x128xi1>
    %42 = vector.shape_cast %37 : vector<1x128xf32> to vector<1x128xf32>
    %43 = vector.broadcast %42 : vector<1x128xf32> to vector<16x128xf32>
    %44 = arith.select %41, %43, %36 : vector<16x128xi1>, vector<16x128xf32>
    %45 = vector.extract_strided_slice %2 {offsets = [5, 0], sizes = [1, 128], strides = [1, 1]} : vector<10x128xf32> to vector<1x128xf32>
    %c5_i32 = arith.constant 5 : i32
    %46 = vector.broadcast %c5_i32 : i32 to vector<16x1xi32>
    %47 = arith.cmpi eq, %0, %46 : vector<16x1xi32>
    %48 = vector.shape_cast %47 : vector<16x1xi1> to vector<16x1xi1>
    %49 = vector.broadcast %48 : vector<16x1xi1> to vector<16x128xi1>
    %50 = vector.shape_cast %45 : vector<1x128xf32> to vector<1x128xf32>
    %51 = vector.broadcast %50 : vector<1x128xf32> to vector<16x128xf32>
    %52 = arith.select %49, %51, %44 : vector<16x128xi1>, vector<16x128xf32>
    %53 = vector.extract_strided_slice %2 {offsets = [6, 0], sizes = [1, 128], strides = [1, 1]} : vector<10x128xf32> to vector<1x128xf32>
    %c6_i32 = arith.constant 6 : i32
    %54 = vector.broadcast %c6_i32 : i32 to vector<16x1xi32>
    %55 = arith.cmpi eq, %0, %54 : vector<16x1xi32>
    %56 = vector.shape_cast %55 : vector<16x1xi1> to vector<16x1xi1>
    %57 = vector.broadcast %56 : vector<16x1xi1> to vector<16x128xi1>
    %58 = vector.shape_cast %53 : vector<1x128xf32> to vector<1x128xf32>
    %59 = vector.broadcast %58 : vector<1x128xf32> to vector<16x128xf32>
    %60 = arith.select %57, %59, %52 : vector<16x128xi1>, vector<16x128xf32>
    %61 = vector.extract_strided_slice %2 {offsets = [7, 0], sizes = [1, 128], strides = [1, 1]} : vector<10x128xf32> to vector<1x128xf32>
    %c7_i32 = arith.constant 7 : i32
    %62 = vector.broadcast %c7_i32 : i32 to vector<16x1xi32>
    %63 = arith.cmpi eq, %0, %62 : vector<16x1xi32>
    %64 = vector.shape_cast %63 : vector<16x1xi1> to vector<16x1xi1>
    %65 = vector.broadcast %64 : vector<16x1xi1> to vector<16x128xi1>
    %66 = vector.shape_cast %61 : vector<1x128xf32> to vector<1x128xf32>
    %67 = vector.broadcast %66 : vector<1x128xf32> to vector<16x128xf32>
    %68 = arith.select %65, %67, %60 : vector<16x128xi1>, vector<16x128xf32>
    %69 = vector.extract_strided_slice %2 {offsets = [8, 0], sizes = [1, 128], strides = [1, 1]} : vector<10x128xf32> to vector<1x128xf32>
    %c8_i32 = arith.constant 8 : i32
    %70 = vector.broadcast %c8_i32 : i32 to vector<16x1xi32>
    %71 = arith.cmpi eq, %0, %70 : vector<16x1xi32>
    %72 = vector.shape_cast %71 : vector<16x1xi1> to vector<16x1xi1>
    %73 = vector.broadcast %72 : vector<16x1xi1> to vector<16x128xi1>
    %74 = vector.shape_cast %69 : vector<1x128xf32> to vector<1x128xf32>
    %75 = vector.broadcast %74 : vector<1x128xf32> to vector<16x128xf32>
    %76 = arith.select %73, %75, %68 : vector<16x128xi1>, vector<16x128xf32>
    %77 = vector.extract_strided_slice %2 {offsets = [9, 0], sizes = [1, 128], strides = [1, 1]} : vector<10x128xf32> to vector<1x128xf32>
    %c9_i32 = arith.constant 9 : i32
    %78 = vector.broadcast %c9_i32 : i32 to vector<16x1xi32>
    %79 = arith.cmpi eq, %0, %78 : vector<16x1xi32>
    %80 = vector.shape_cast %79 : vector<16x1xi1> to vector<16x1xi1>
    %81 = vector.broadcast %80 : vector<16x1xi1> to vector<16x128xi1>
    %82 = vector.shape_cast %77 : vector<1x128xf32> to vector<1x128xf32>
    %83 = vector.broadcast %82 : vector<1x128xf32> to vector<16x128xf32>
    %84 = arith.select %81, %83, %76 : vector<16x128xi1>, vector<16x128xf32>
    %85 = vector.extract_strided_slice %3 {offsets = [0, 0], sizes = [1, 128], strides = [1, 1]} : vector<8x128xf32> to vector<1x128xf32>
    %c0_i32_7 = arith.constant 0 : i32
    %86 = vector.broadcast %c0_i32_7 : i32 to vector<16x1xi32>
    %87 = arith.cmpi eq, %1, %86 : vector<16x1xi32>
    %cst_8 = arith.constant 0.000000e+00 : f32
    %88 = vector.shape_cast %87 : vector<16x1xi1> to vector<16x1xi1>
    %89 = vector.broadcast %88 : vector<16x1xi1> to vector<16x128xi1>
    %90 = vector.shape_cast %85 : vector<1x128xf32> to vector<1x128xf32>
    %91 = vector.broadcast %90 : vector<1x128xf32> to vector<16x128xf32>
    %92 = vector.broadcast %cst_8 : f32 to vector<16x128xf32>
    %93 = arith.select %89, %91, %92 : vector<16x128xi1>, vector<16x128xf32>
    %94 = arith.addf %84, %93 : vector<16x128xf32>
    %95 = vector.extract_strided_slice %3 {offsets = [1, 0], sizes = [1, 128], strides = [1, 1]} : vector<8x128xf32> to vector<1x128xf32>
    %c1_i32_9 = arith.constant 1 : i32
    %96 = vector.broadcast %c1_i32_9 : i32 to vector<16x1xi32>
    %97 = arith.cmpi eq, %1, %96 : vector<16x1xi32>
    %cst_10 = arith.constant 0.000000e+00 : f32
    %98 = vector.shape_cast %97 : vector<16x1xi1> to vector<16x1xi1>
    %99 = vector.broadcast %98 : vector<16x1xi1> to vector<16x128xi1>
    %100 = vector.shape_cast %95 : vector<1x128xf32> to vector<1x128xf32>
    %101 = vector.broadcast %100 : vector<1x128xf32> to vector<16x128xf32>
    %102 = vector.broadcast %cst_10 : f32 to vector<16x128xf32>
    %103 = arith.select %99, %101, %102 : vector<16x128xi1>, vector<16x128xf32>
    %104 = arith.addf %94, %103 : vector<16x128xf32>
    %105 = vector.extract_strided_slice %3 {offsets = [2, 0], sizes = [1, 128], strides = [1, 1]} : vector<8x128xf32> to vector<1x128xf32>
    %c2_i32_11 = arith.constant 2 : i32
    %106 = vector.broadcast %c2_i32_11 : i32 to vector<16x1xi32>
    %107 = arith.cmpi eq, %1, %106 : vector<16x1xi32>
    %cst_12 = arith.constant 0.000000e+00 : f32
    %108 = vector.shape_cast %107 : vector<16x1xi1> to vector<16x1xi1>
    %109 = vector.broadcast %108 : vector<16x1xi1> to vector<16x128xi1>
    %110 = vector.shape_cast %105 : vector<1x128xf32> to vector<1x128xf32>
    %111 = vector.broadcast %110 : vector<1x128xf32> to vector<16x128xf32>
    %112 = vector.broadcast %cst_12 : f32 to vector<16x128xf32>
    %113 = arith.select %109, %111, %112 : vector<16x128xi1>, vector<16x128xf32>
    %114 = arith.addf %104, %113 : vector<16x128xf32>
    %115 = vector.extract_strided_slice %3 {offsets = [3, 0], sizes = [1, 128], strides = [1, 1]} : vector<8x128xf32> to vector<1x128xf32>
    %c3_i32_13 = arith.constant 3 : i32
    %116 = vector.broadcast %c3_i32_13 : i32 to vector<16x1xi32>
    %117 = arith.cmpi eq, %1, %116 : vector<16x1xi32>
    %cst_14 = arith.constant 0.000000e+00 : f32
    %118 = vector.shape_cast %117 : vector<16x1xi1> to vector<16x1xi1>
    %119 = vector.broadcast %118 : vector<16x1xi1> to vector<16x128xi1>
    %120 = vector.shape_cast %115 : vector<1x128xf32> to vector<1x128xf32>
    %121 = vector.broadcast %120 : vector<1x128xf32> to vector<16x128xf32>
    %122 = vector.broadcast %cst_14 : f32 to vector<16x128xf32>
    %123 = arith.select %119, %121, %122 : vector<16x128xi1>, vector<16x128xf32>
    %124 = arith.addf %114, %123 : vector<16x128xf32>
    %125 = vector.extract_strided_slice %3 {offsets = [4, 0], sizes = [1, 128], strides = [1, 1]} : vector<8x128xf32> to vector<1x128xf32>
    %c4_i32_15 = arith.constant 4 : i32
    %126 = vector.broadcast %c4_i32_15 : i32 to vector<16x1xi32>
    %127 = arith.cmpi eq, %1, %126 : vector<16x1xi32>
    %cst_16 = arith.constant 0.000000e+00 : f32
    %128 = vector.shape_cast %127 : vector<16x1xi1> to vector<16x1xi1>
    %129 = vector.broadcast %128 : vector<16x1xi1> to vector<16x128xi1>
    %130 = vector.shape_cast %125 : vector<1x128xf32> to vector<1x128xf32>
    %131 = vector.broadcast %130 : vector<1x128xf32> to vector<16x128xf32>
    %132 = vector.broadcast %cst_16 : f32 to vector<16x128xf32>
    %133 = arith.select %129, %131, %132 : vector<16x128xi1>, vector<16x128xf32>
    %134 = arith.addf %124, %133 : vector<16x128xf32>
    %135 = vector.extract_strided_slice %3 {offsets = [5, 0], sizes = [1, 128], strides = [1, 1]} : vector<8x128xf32> to vector<1x128xf32>
    %c5_i32_17 = arith.constant 5 : i32
    %136 = vector.broadcast %c5_i32_17 : i32 to vector<16x1xi32>
    %137 = arith.cmpi eq, %1, %136 : vector<16x1xi32>
    %cst_18 = arith.constant 0.000000e+00 : f32
    %138 = vector.shape_cast %137 : vector<16x1xi1> to vector<16x1xi1>
    %139 = vector.broadcast %138 : vector<16x1xi1> to vector<16x128xi1>
    %140 = vector.shape_cast %135 : vector<1x128xf32> to vector<1x128xf32>
    %141 = vector.broadcast %140 : vector<1x128xf32> to vector<16x128xf32>
    %142 = vector.broadcast %cst_18 : f32 to vector<16x128xf32>
    %143 = arith.select %139, %141, %142 : vector<16x128xi1>, vector<16x128xf32>
    %144 = arith.addf %134, %143 : vector<16x128xf32>
    %145 = vector.extract_strided_slice %3 {offsets = [6, 0], sizes = [1, 128], strides = [1, 1]} : vector<8x128xf32> to vector<1x128xf32>
    %c6_i32_19 = arith.constant 6 : i32
    %146 = vector.broadcast %c6_i32_19 : i32 to vector<16x1xi32>
    %147 = arith.cmpi eq, %1, %146 : vector<16x1xi32>
    %cst_20 = arith.constant 0.000000e+00 : f32
    %148 = vector.shape_cast %147 : vector<16x1xi1> to vector<16x1xi1>
    %149 = vector.broadcast %148 : vector<16x1xi1> to vector<16x128xi1>
    %150 = vector.shape_cast %145 : vector<1x128xf32> to vector<1x128xf32>
    %151 = vector.broadcast %150 : vector<1x128xf32> to vector<16x128xf32>
    %152 = vector.broadcast %cst_20 : f32 to vector<16x128xf32>
    %153 = arith.select %149, %151, %152 : vector<16x128xi1>, vector<16x128xf32>
    %154 = arith.addf %144, %153 : vector<16x128xf32>
    %155 = vector.extract_strided_slice %3 {offsets = [7, 0], sizes = [1, 128], strides = [1, 1]} : vector<8x128xf32> to vector<1x128xf32>
    %c7_i32_21 = arith.constant 7 : i32
    %156 = vector.broadcast %c7_i32_21 : i32 to vector<16x1xi32>
    %157 = arith.cmpi eq, %1, %156 : vector<16x1xi32>
    %cst_22 = arith.constant 0.000000e+00 : f32
    %158 = vector.shape_cast %157 : vector<16x1xi1> to vector<16x1xi1>
    %159 = vector.broadcast %158 : vector<16x1xi1> to vector<16x128xi1>
    %160 = vector.shape_cast %155 : vector<1x128xf32> to vector<1x128xf32>
    %161 = vector.broadcast %160 : vector<1x128xf32> to vector<16x128xf32>
    %162 = vector.broadcast %cst_22 : f32 to vector<16x128xf32>
    %163 = arith.select %159, %161, %162 : vector<16x128xi1>, vector<16x128xf32>
    %164 = arith.addf %154, %163 : vector<16x128xf32>
    %c0_23 = arith.constant 0 : index
    %c0_24 = arith.constant 0 : index
    %165 = vector.load %arg5[%c0_23, %c0_24] : memref<16x128xf32, #tpu.memory_space<vmem>>, vector<16x128xf32>
    tpu.vector_store %arg5[%c0_23, %c0_24], %164 {strides = array<i32>} : memref<16x128xf32, #tpu.memory_space<vmem>>, vector<16x128xf32>,
    return
  }
  func.func @transform_0(%arg0: i32) -> (i32, i32) {
    %c0_i32 = arith.constant 0 : i32
    %c0_i32_0 = arith.constant 0 : i32
    return %arg0, %c0_i32 : i32, i32
  }
  func.func @transform_1(%arg0: i32) -> (i32, i32) {
    %c0_i32 = arith.constant 0 : i32
    %c0_i32_0 = arith.constant 0 : i32
    return %arg0, %c0_i32 : i32, i32
  }
  func.func @transform_2(%arg0: i32) -> (i32, i32) {
    %c0_i32 = arith.constant 0 : i32
    %c0_i32_0 = arith.constant 0 : i32
    %c0_i32_1 = arith.constant 0 : i32
    return %c0_i32, %c0_i32_0 : i32, i32
  }
  func.func @transform_3(%arg0: i32) -> (i32, i32) {
    %c0_i32 = arith.constant 0 : i32
    %c0_i32_0 = arith.constant 0 : i32
    %c0_i32_1 = arith.constant 0 : i32
    return %c0_i32, %c0_i32_0 : i32, i32
  }
  func.func @transform_4(%arg0: i32) -> (i32, i32) {
    %c0_i32 = arith.constant 0 : i32
    %c0_i32_0 = arith.constant 0 : i32
    return %arg0, %c0_i32 : i32, i32
  }
}

</mosaic_0001>

<llo_original>
// kernel: tpu_custom_call.1
$region0: #{tpu_custom_call.1}
  #allocation0 [shape = 'u32[]', space=smem, size = 0x4, offset = 0x4, fixed_abs, tag = 'smem constant byte address 0x4 - core index']
  #allocation1 [shape = 'u32[144,128]{1,0:T(1,128)}', space=vmem, size = 0x12000, scoped, tag = 'internal scratch']
  %s0 = inlined_call_operand.vmem [shape: s32[16,1], index: 0, kind: input, shape index: {}]
  %s1 = inlined_call_operand.vmem [shape: s32[16,1], index: 1, kind: input, shape index: {}]
  %s2 = inlined_call_operand.vmem [shape: f32[10,128], index: 2, kind: input, shape index: {}]
  %s3 = inlined_call_operand.vmem [shape: f32[8,128], index: 3, kind: input, shape index: {}]
  %s4 = inlined_call_operand.hbm [shape: f32[16,128], index: 4, kind: output, shape index: {}]
  %s5 = sld [smem:[#allocation0]]
  $region26: #{tpu_custom_call.1} parent=0
    _
  %s7 = ssub.s32 1, %s5
  %s8 = scalar_select 0, %s7, %s5
  $region1: #{tpu_custom_call.1} parent=0
    #allocation2 [shape = 'u8[8192]{0}', space=vmem, size = 0x2000, scoped, tag = 'output window, operand 0, single buffered']
    #allocation3 [shape = 's32[1]{0}', space=sflag, size = 0x4, scoped, tag = 'scoped memory for tpu_custom_call.1']
    %9 = vsyncpa [#allocation3], 0
    // Predicated region
    $region2: #{tpu_custom_call.1} parent=1 // pred_check
      _
    $region3: #{tpu_custom_call.1} parent=1 // pred_check_branch
      %11 = sbr.rel (0) target = $region5
    $region4: #{tpu_custom_call.1} parent=1 // pred_region
      _
    $region5: #{tpu_custom_call.1} parent=1 // pred_fallthru
      _
    // Predicated region
    $region6: #{tpu_custom_call.1} parent=1 // pred_check
      _
    $region7: #{tpu_custom_call.1} parent=1 // pred_check_branch
      %13 = sbr.rel (0) target = $region9
    $region8: #{tpu_custom_call.1} parent=1 // pred_region
      _
    $region9: #{tpu_custom_call.1} parent=1 // pred_fallthru
      _
    // Predicated region
    $region10: #{tpu_custom_call.1} parent=1 // pred_check
      _
    $region11: #{tpu_custom_call.1} parent=1 // pred_check_branch
      %15 = sbr.rel (0) target = $region13
    $region12: #{tpu_custom_call.1} parent=1 // pred_region
      _
    $region13: #{tpu_custom_call.1} parent=1 // pred_fallthru
      _
    // Predicated region
    $region14: #{tpu_custom_call.1} parent=1 // pred_check
      _
    $region15: #{tpu_custom_call.1} parent=1 // pred_check_branch
      %17 = sbr.rel (0) target = $region17
    $region16: #{tpu_custom_call.1} parent=1 // pred_region
      _
    $region17: #{tpu_custom_call.1} parent=1 // pred_fallthru
      _
    %v18 = vld [vmem:[%s0] sm:$0xff]
    %v19 = vld [vmem:[%s0 + $0x8] sm:$0xff]
    %v20 = vld [vmem:[%s1] sm:$0xff]
    %v21 = vld [vmem:[%s1 + $0x8] sm:$0xff]
    %v22 = vld [vmem:[%s2] sm:$0xff]
    %v23 = vld [vmem:[%s2 + $0x8] sm:$0x3]
    %v24 = vld [vmem:[%s3] sm:$0xff]
    %vm25 = vcmp.eq.s32.totalorder %v18, 0
    %vm26 = vcmp.eq.s32.totalorder %v19, 0
    %v27 = vsel %vm25, 1, 0
    %v28 = vsel %vm26, 1, 0
    %29 = vset.pattern.permute.xlu0 0
    %30 = vperm.xlu0 %29, %v27
    %v31 = vpop.permute.xlu0 %30
    %32 = vset.pattern.permute.xlu0 0
    %33 = vperm.xlu0 %32, %v28
    %v34 = vpop.permute.xlu0 %33
    %vm35 = vcmp.eq.s32.totalorder %v31, 1
    %vm36 = vcmp.eq.s32.totalorder %v34, 1
    %v37 = vlaneseq
    %v38 = vshrl.u32 %v37, 7
    %v39 = vsub.s32 0, %v38
    %v40 = vrot.slane %v22, %v39
    %v41 = vsel %vm35, %v40, 0.0
    %v42 = vsel %vm36, %v40, 0.0
    %vm43 = vcmp.eq.s32.totalorder %v18, 1
    %vm44 = vcmp.eq.s32.totalorder %v19, 1
    %v45 = vsel %vm43, 1, 0
    %v46 = vsel %vm44, 1, 0
    %47 = vset.pattern.permute.xlu0 0
    %48 = vperm.xlu0 %47, %v45
    %v49 = vpop.permute.xlu0 %48
    %50 = vset.pattern.permute.xlu0 0
    %51 = vperm.xlu0 %50, %v46
    %v52 = vpop.permute.xlu0 %51
    %vm53 = vcmp.eq.s32.totalorder %v49, 1
    %vm54 = vcmp.eq.s32.totalorder %v52, 1
    %v55 = vlaneseq
    %v56 = vshrl.u32 %v55, 7
    %v57 = vsub.s32 1, %v56
    %v58 = vrot.slane %v22, %v57
    %v59 = vsel %vm53, %v58, %v41
    %v60 = vsel %vm54, %v58, %v42
    %vm61 = vcmp.eq.s32.totalorder %v18, 2
    %vm62 = vcmp.eq.s32.totalorder %v19, 2
    %v63 = vsel %vm61, 1, 0
    %v64 = vsel %vm62, 1, 0
    %65 = vset.pattern.permute.xlu0 0
    %66 = vperm.xlu0 %65, %v63
    %v67 = vpop.permute.xlu0 %66
    %68 = vset.pattern.permute.xlu0 0
    %69 = vperm.xlu0 %68, %v64
    %v70 = vpop.permute.xlu0 %69
    %vm71 = vcmp.eq.s32.totalorder %v67, 1
    %vm72 = vcmp.eq.s32.totalorder %v70, 1
    %v73 = vlaneseq
    %v74 = vshrl.u32 %v73, 7
    %v75 = vsub.s32 2, %v74
    %v76 = vrot.slane %v22, %v75
    %v77 = vsel %vm71, %v76, %v59
    %v78 = vsel %vm72, %v76, %v60
    %vm79 = vcmp.eq.s32.totalorder %v18, 3
    %vm80 = vcmp.eq.s32.totalorder %v19, 3
    %v81 = vsel %vm79, 1, 0
    %v82 = vsel %vm80, 1, 0
    %83 = vset.pattern.permute.xlu0 0
    %84 = vperm.xlu0 %83, %v81
    %v85 = vpop.permute.xlu0 %84
    %86 = vset.pattern.permute.xlu0 0
    %87 = vperm.xlu0 %86, %v82
    %v88 = vpop.permute.xlu0 %87
    %vm89 = vcmp.eq.s32.totalorder %v85, 1
    %vm90 = vcmp.eq.s32.totalorder %v88, 1
    %v91 = vlaneseq
    %v92 = vshrl.u32 %v91, 7
    %v93 = vsub.s32 3, %v92
    %v94 = vrot.slane %v22, %v93
    %v95 = vsel %vm89, %v94, %v77
    %v96 = vsel %vm90, %v94, %v78
    %vm97 = vcmp.eq.s32.totalorder %v18, 4
    %vm98 = vcmp.eq.s32.totalorder %v19, 4
    %v99 = vsel %vm97, 1, 0
    %v100 = vsel %vm98, 1, 0
    %101 = vset.pattern.permute.xlu0 0
    %102 = vperm.xlu0 %101, %v99
    %v103 = vpop.permute.xlu0 %102
    %104 = vset.pattern.permute.xlu0 0
    %105 = vperm.xlu0 %104, %v100
    %v106 = vpop.permute.xlu0 %105
    %vm107 = vcmp.eq.s32.totalorder %v103, 1
    %vm108 = vcmp.eq.s32.totalorder %v106, 1
    %v109 = vlaneseq
    %v110 = vshrl.u32 %v109, 7
    %v111 = vsub.s32 4, %v110
    %v112 = vrot.slane %v22, %v111
    %v113 = vsel %vm107, %v112, %v95
    %v114 = vsel %vm108, %v112, %v96
    %vm115 = vcmp.eq.s32.totalorder %v18, 5
    %vm116 = vcmp.eq.s32.totalorder %v19, 5
    %v117 = vsel %vm115, 1, 0
    %v118 = vsel %vm116, 1, 0
    %119 = vset.pattern.permute.xlu0 0
    %120 = vperm.xlu0 %119, %v117
    %v121 = vpop.permute.xlu0 %120
    %122 = vset.pattern.permute.xlu0 0
    %123 = vperm.xlu0 %122, %v118
    %v124 = vpop.permute.xlu0 %123
    %vm125 = vcmp.eq.s32.totalorder %v121, 1
    %vm126 = vcmp.eq.s32.totalorder %v124, 1
    %v127 = vlaneseq
    %v128 = vshrl.u32 %v127, 7
    %v129 = vsub.s32 5, %v128
    %v130 = vrot.slane %v22, %v129
    %v131 = vsel %vm125, %v130, %v113
    %v132 = vsel %vm126, %v130, %v114
    %vm133 = vcmp.eq.s32.totalorder %v18, 6
    %vm134 = vcmp.eq.s32.totalorder %v19, 6
    %v135 = vsel %vm133, 1, 0
    %v136 = vsel %vm134, 1, 0
    %137 = vset.pattern.permute.xlu0 0
    %138 = vperm.xlu0 %137, %v135
    %v139 = vpop.permute.xlu0 %138
    %140 = vset.pattern.permute.xlu0 0
    %141 = vperm.xlu0 %140, %v136
    %v142 = vpop.permute.xlu0 %141
    %vm143 = vcmp.eq.s32.totalorder %v139, 1
    %vm144 = vcmp.eq.s32.totalorder %v142, 1
    %v145 = vlaneseq
    %v146 = vshrl.u32 %v145, 7
    %v147 = vsub.s32 6, %v146
    %v148 = vrot.slane %v22, %v147
    %v149 = vsel %vm143, %v148, %v131
    %v150 = vsel %vm144, %v148, %v132
    %vm151 = vcmp.eq.s32.totalorder %v18, 7
    %vm152 = vcmp.eq.s32.totalorder %v19, 7
    %v153 = vsel %vm151, 1, 0
    %v154 = vsel %vm152, 1, 0
    %155 = vset.pattern.permute.xlu0 0
    %156 = vperm.xlu0 %155, %v153
    %v157 = vpop.permute.xlu0 %156
    %158 = vset.pattern.permute.xlu0 0
    %159 = vperm.xlu0 %158, %v154
    %v160 = vpop.permute.xlu0 %159
    %vm161 = vcmp.eq.s32.totalorder %v157, 1
    %vm162 = vcmp.eq.s32.totalorder %v160, 1
    %v163 = vlaneseq
    %v164 = vshrl.u32 %v163, 7
    %v165 = vsub.s32 7, %v164
    %v166 = vrot.slane %v22, %v165
    %v167 = vsel %vm161, %v166, %v149
    %v168 = vsel %vm162, %v166, %v150
    %vm169 = vcmp.eq.s32.totalorder %v18, 8
    %vm170 = vcmp.eq.s32.totalorder %v19, 8
    %v171 = vsel %vm169, 1, 0
    %v172 = vsel %vm170, 1, 0
    %173 = vset.pattern.permute.xlu0 0
    %174 = vperm.xlu0 %173, %v171
    %v175 = vpop.permute.xlu0 %174
    %176 = vset.pattern.permute.xlu0 0
    %177 = vperm.xlu0 %176, %v172
    %v178 = vpop.permute.xlu0 %177
    %vm179 = vcmp.eq.s32.totalorder %v175, 1
    %vm180 = vcmp.eq.s32.totalorder %v178, 1
    %v181 = vlaneseq
    %v182 = vshrl.u32 %v181, 7
    %v183 = vsub.s32 0, %v182
    %v184 = vrot.slane %v23, %v183
    %v185 = vsel %vm179, %v184, %v167
    %v186 = vsel %vm180, %v184, %v168
    %vm187 = vcmp.eq.s32.totalorder %v18, 9
    %vm188 = vcmp.eq.s32.totalorder %v19, 9
    %v189 = vsel %vm187, 1, 0
    %v190 = vsel %vm188, 1, 0
    %191 = vset.pattern.permute.xlu0 0
    %192 = vperm.xlu0 %191, %v189
    %v193 = vpop.permute.xlu0 %192
    %194 = vset.pattern.permute.xlu0 0
    %195 = vperm.xlu0 %194, %v190
    %v196 = vpop.permute.xlu0 %195
    %vm197 = vcmp.eq.s32.totalorder %v193, 1
    %vm198 = vcmp.eq.s32.totalorder %v196, 1
    %v199 = vlaneseq
    %v200 = vshrl.u32 %v199, 7
    %v201 = vsub.s32 1, %v200
    %v202 = vrot.slane %v23, %v201
    %v203 = vsel %vm197, %v202, %v185
    %v204 = vsel %vm198, %v202, %v186
    %vm205 = vcmp.eq.s32.totalorder %v20, 0
    %vm206 = vcmp.eq.s32.totalorder %v21, 0
    %v207 = vsel %vm205, 1, 0
    %v208 = vsel %vm206, 1, 0
    %209 = vset.pattern.permute.xlu0 0
    %210 = vperm.xlu0 %209, %v207
    %v211 = vpop.permute.xlu0 %210
    %212 = vset.pattern.permute.xlu0 0
    %213 = vperm.xlu0 %212, %v208
    %v214 = vpop.permute.xlu0 %213
    %vm215 = vcmp.eq.s32.totalorder %v211, 1
    %vm216 = vcmp.eq.s32.totalorder %v214, 1
    %v217 = vlaneseq
    %v218 = vshrl.u32 %v217, 7
    %v219 = vsub.s32 0, %v218
    %v220 = vrot.slane %v24, %v219
    %v221 = vsel %vm215, %v220, 0.0
    %v222 = vsel %vm216, %v220, 0.0
    %v223 = vadd.f32 %v203, %v221
    %v224 = vadd.f32 %v204, %v222
    %vm225 = vcmp.eq.s32.totalorder %v20, 1
    %vm226 = vcmp.eq.s32.totalorder %v21, 1
    %v227 = vsel %vm225, 1, 0
    %v228 = vsel %vm226, 1, 0
    %229 = vset.pattern.permute.xlu0 0
    %230 = vperm.xlu0 %229, %v227
    %v231 = vpop.permute.xlu0 %230
    %232 = vset.pattern.permute.xlu0 0
    %233 = vperm.xlu0 %232, %v228
    %v234 = vpop.permute.xlu0 %233
    %vm235 = vcmp.eq.s32.totalorder %v231, 1
    %vm236 = vcmp.eq.s32.totalorder %v234, 1
    %v237 = vlaneseq
    %v238 = vshrl.u32 %v237, 7
    %v239 = vsub.s32 1, %v238
    %v240 = vrot.slane %v24, %v239
    %v241 = vsel %vm235, %v240, 0.0
    %v242 = vsel %vm236, %v240, 0.0
    %v243 = vadd.f32 %v223, %v241
    %v244 = vadd.f32 %v224, %v242
    %vm245 = vcmp.eq.s32.totalorder %v20, 2
    %vm246 = vcmp.eq.s32.totalorder %v21, 2
    %v247 = vsel %vm245, 1, 0
    %v248 = vsel %vm246, 1, 0
    %249 = vset.pattern.permute.xlu0 0
    %250 = vperm.xlu0 %249, %v247
    %v251 = vpop.permute.xlu0 %250
    %252 = vset.pattern.permute.xlu0 0
    %253 = vperm.xlu0 %252, %v248
    %v254 = vpop.permute.xlu0 %253
    %vm255 = vcmp.eq.s32.totalorder %v251, 1
    %vm256 = vcmp.eq.s32.totalorder %v254, 1
    %v257 = vlaneseq
    %v258 = vshrl.u32 %v257, 7
    %v259 = vsub.s32 2, %v258
    %v260 = vrot.slane %v24, %v259
    %v261 = vsel %vm255, %v260, 0.0
    %v262 = vsel %vm256, %v260, 0.0
    %v263 = vadd.f32 %v243, %v261
    %v264 = vadd.f32 %v244, %v262
    %vm265 = vcmp.eq.s32.totalorder %v20, 3
    %vm266 = vcmp.eq.s32.totalorder %v21, 3
    %v267 = vsel %vm265, 1, 0
    %v268 = vsel %vm266, 1, 0
    %269 = vset.pattern.permute.xlu0 0
    %270 = vperm.xlu0 %269, %v267
    %v271 = vpop.permute.xlu0 %270
    %272 = vset.pattern.permute.xlu0 0
    %273 = vperm.xlu0 %272, %v268
    %v274 = vpop.permute.xlu0 %273
    %vm275 = vcmp.eq.s32.totalorder %v271, 1
    %vm276 = vcmp.eq.s32.totalorder %v274, 1
    %v277 = vlaneseq
    %v278 = vshrl.u32 %v277, 7
    %v279 = vsub.s32 3, %v278
    %v280 = vrot.slane %v24, %v279
    %v281 = vsel %vm275, %v280, 0.0
    %v282 = vsel %vm276, %v280, 0.0
    %v283 = vadd.f32 %v263, %v281
    %v284 = vadd.f32 %v264, %v282
    %vm285 = vcmp.eq.s32.totalorder %v20, 4
    %vm286 = vcmp.eq.s32.totalorder %v21, 4
    %v287 = vsel %vm285, 1, 0
    %v288 = vsel %vm286, 1, 0
    %289 = vset.pattern.permute.xlu0 0
    %290 = vperm.xlu0 %289, %v287
    %v291 = vpop.permute.xlu0 %290
    %292 = vset.pattern.permute.xlu0 0
    %293 = vperm.xlu0 %292, %v288
    %v294 = vpop.permute.xlu0 %293
    %vm295 = vcmp.eq.s32.totalorder %v291, 1
    %vm296 = vcmp.eq.s32.totalorder %v294, 1
    %v297 = vlaneseq
    %v298 = vshrl.u32 %v297, 7
    %v299 = vsub.s32 4, %v298
    %v300 = vrot.slane %v24, %v299
    %v301 = vsel %vm295, %v300, 0.0
    %v302 = vsel %vm296, %v300, 0.0
    %v303 = vadd.f32 %v283, %v301
    %v304 = vadd.f32 %v284, %v302
    %vm305 = vcmp.eq.s32.totalorder %v20, 5
    %vm306 = vcmp.eq.s32.totalorder %v21, 5
    %v307 = vsel %vm305, 1, 0
    %v308 = vsel %vm306, 1, 0
    %309 = vset.pattern.permute.xlu0 0
    %310 = vperm.xlu0 %309, %v307
    %v311 = vpop.permute.xlu0 %310
    %312 = vset.pattern.permute.xlu0 0
    %313 = vperm.xlu0 %312, %v308
    %v314 = vpop.permute.xlu0 %313
    %vm315 = vcmp.eq.s32.totalorder %v311, 1
    %vm316 = vcmp.eq.s32.totalorder %v314, 1
    %v317 = vlaneseq
    %v318 = vshrl.u32 %v317, 7
    %v319 = vsub.s32 5, %v318
    %v320 = vrot.slane %v24, %v319
    %v321 = vsel %vm315, %v320, 0.0
    %v322 = vsel %vm316, %v320, 0.0
    %v323 = vadd.f32 %v303, %v321
    %v324 = vadd.f32 %v304, %v322
    %vm325 = vcmp.eq.s32.totalorder %v20, 6
    %vm326 = vcmp.eq.s32.totalorder %v21, 6
    %v327 = vsel %vm325, 1, 0
    %v328 = vsel %vm326, 1, 0
    %329 = vset.pattern.permute.xlu0 0
    %330 = vperm.xlu0 %329, %v327
    %v331 = vpop.permute.xlu0 %330
    %332 = vset.pattern.permute.xlu0 0
    %333 = vperm.xlu0 %332, %v328
    %v334 = vpop.permute.xlu0 %333
    %vm335 = vcmp.eq.s32.totalorder %v331, 1
    %vm336 = vcmp.eq.s32.totalorder %v334, 1
    %v337 = vlaneseq
    %v338 = vshrl.u32 %v337, 7
    %v339 = vsub.s32 6, %v338
    %v340 = vrot.slane %v24, %v339
    %v341 = vsel %vm335, %v340, 0.0
    %v342 = vsel %vm336, %v340, 0.0
    %v343 = vadd.f32 %v323, %v341
    %v344 = vadd.f32 %v324, %v342
    %vm345 = vcmp.eq.s32.totalorder %v20, 7
    %vm346 = vcmp.eq.s32.totalorder %v21, 7
    %v347 = vsel %vm345, 1, 0
    %v348 = vsel %vm346, 1, 0
    %349 = vset.pattern.permute.xlu0 0
    %350 = vperm.xlu0 %349, %v347
    %v351 = vpop.permute.xlu0 %350
    %352 = vset.pattern.permute.xlu0 0
    %353 = vperm.xlu0 %352, %v348
    %v354 = vpop.permute.xlu0 %353
    %vm355 = vcmp.eq.s32.totalorder %v351, 1
    %vm356 = vcmp.eq.s32.totalorder %v354, 1
    %v357 = vlaneseq
    %v358 = vshrl.u32 %v357, 7
    %v359 = vsub.s32 7, %v358
    %v360 = vrot.slane %v24, %v359
    %v361 = vsel %vm355, %v360, 0.0
    %v362 = vsel %vm356, %v360, 0.0
    %v363 = vadd.f32 %v343, %v361
    %v364 = vadd.f32 %v344, %v362
    %365 = vst [vmem:[#allocation2] sm:$0xff] %v363
    %366 = vst [vmem:[#allocation2 + $0x8] sm:$0xff] %v364
    // Predicated region
    $region18: #{tpu_custom_call.1} parent=1 // pred_check
      _
    $region19: #{tpu_custom_call.1} parent=1 // pred_check_branch
      %368 = sbr.rel (0) target = $region21
    $region20: #{tpu_custom_call.1} parent=1 // pred_region
      %s370 = ssub.s32 256, 256
      %371 = vsyncadd [#allocation3], %s370
      %s372 = sshll.u32 [#allocation2], 4
      %s373 = int_to_ptr.vmem [resolvable:$true] %s372
      %378 = dma.vmem_to_hbm [thread:$0]  %s373, 256, %s4, [#allocation3], 128, 128, 8
    $region21: #{tpu_custom_call.1} parent=1 // pred_fallthru
      _
    // Predicated region
    $region22: #{tpu_custom_call.1} parent=1 // pred_check
      _
    $region23: #{tpu_custom_call.1} parent=1 // pred_check_branch
      %380 = sbr.rel (0) target = $region25
    $region24: #{tpu_custom_call.1} parent=1 // pred_region
      %381 = dma.done [#allocation3], 256
    $region25: #{tpu_custom_call.1} parent=1 // pred_fallthru
      _
    %382 = vsyncpa [#allocation3], 1

</llo_original>
